<compile_context>
chip_gen: v7x
topology: tpu7x:2x2x1
jax: 0.10.0
libtpu: 0.0.40
codegen_flags: <defaults>
</compile_context>

<pallas_src>
import jax
import jax.numpy as jnp
from jax.experimental import pallas as pl
from jax.experimental.pallas import tpu as pltpu


def lstm_kernel(x_ref, wih_ref, whh_ref, b_ref, out_ref, hid_ref, cell_ref, wx_ref):
    T, BB, I = x_ref.shape
    H = whh_ref.shape[0]

    # ---- Prologue (off the recurrent path) --------------------------------
    # Input projection for ALL timesteps, time-major, staged in VMEM scratch:
    #   wx[t, b, :] = x[t, b, :] @ W_ih^T + (b_ih + b_hh),  gate order [i,f,o,g]
    x = x_ref[...].astype(jnp.float32)                     # (T, BB, I)
    wih = wih_ref[...]                                     # (I, 4H)
    bias = b_ref[...].reshape(1, 1, 4 * H)                 # (1, 1, 4H)
    if I <= 8:
        # I broadcast-FMAs on the VPU instead of a degenerate K=I MXU matmul.
        wx = bias + x[:, :, 0:1] * wih[0].reshape(1, 1, 4 * H)
        for k in range(1, I):
            wx = wx + x[:, :, k:k + 1] * wih[k].reshape(1, 1, 4 * H)
    else:
        wx = (jnp.dot(x.reshape(T * BB, I), wih,
                      preferred_element_type=jnp.float32)
              + b_ref[...]).reshape(T, BB, 4 * H)
    wx_ref[...] = wx

    whh = whh_ref[...]                                     # (H, 4H), hoisted once

    # Lane mask for full-vreg activations: lanes [0, 3H) -> sigmoid (i, f, o),
    # lanes [3H, 4H) -> tanh (g).  Hoisted out of the recurrence.
    sig_mask = jax.lax.broadcasted_iota(jnp.int32, (BB, 4 * H), 1) < 3 * H

    h = jnp.zeros((BB, H), jnp.float32)
    c = jnp.zeros((BB, H), jnp.float32)

    # ---- Recurrence: T is static -> fully unrolled; h/c stay in vregs. ----
    h_stage = []
    for t in range(T):
        gates = wx_ref[t] + jnp.dot(h, whh, preferred_element_type=jnp.float32)
        act = jnp.where(sig_mask, jax.nn.sigmoid(gates), jnp.tanh(gates))
        i_g = act[:, 0 * H:1 * H]
        f_g = act[:, 1 * H:2 * H]
        o_g = act[:, 2 * H:3 * H]
        g_g = act[:, 3 * H:4 * H]
        c = f_g * c + i_g * g_g
        h = o_g * jnp.tanh(c)

        # Coalesce per-step (BB, H) results into full 128-lane stores.
        h_stage.append(h)
        if len(h_stage) * H >= 128 or t == T - 1:
            start = (t + 1 - len(h_stage)) * H
            tile = jnp.concatenate(h_stage, axis=1) if len(h_stage) > 1 else h_stage[0]
            out_ref[:, start:start + len(h_stage) * H] = tile.astype(out_ref.dtype)
            h_stage = []

    # Final states written exactly once, after the loop.
    hid_ref[...] = h.astype(hid_ref.dtype)
    cell_ref[...] = c.astype(cell_ref.dtype)


def encoder_rnn_forward(x_bti, w_ih, w_hh, b_ih, b_hh):
    """x_bti: (B, T, I) batch-first, like torch.nn.LSTM(batch_first=True).

    Returns (output (B,T,H), hidden (1,B,H), cellstate (1,B,H))."""
    B, T, I = x_bti.shape
    H = w_hh.shape[1]
    assert w_ih.shape == (4 * H, I) and w_hh.shape == (4 * H, H)

    # Permute PyTorch gate blocks [i, f, g, o] -> [i, f, o, g] so the sigmoid
    # gates occupy a contiguous lane prefix (single lane-mask select in-kernel).
    def reorder(p):
        i, f, g, o = jnp.split(p, 4, axis=0)
        return jnp.concatenate([i, f, o, g], axis=0)

    wih_t = reorder(w_ih).T.astype(jnp.float32)            # (I, 4H)
    whh_t = reorder(w_hh).T.astype(jnp.float32)            # (H, 4H)
    bias = reorder(b_ih + b_hh).reshape(1, 4 * H).astype(jnp.float32)

    # Time-major input so the per-step wx read inside the kernel is contiguous.
    x_tbi = jnp.transpose(x_bti, (1, 0, 2))                # (T, B, I)

    # Batch-block size: one block for small batches; for larger batches split in
    # two so the 'parallel' grid axis can be sharded across v7x's two
    # TensorCores (no-op on single-core v5e/v6e).
    BB = B // 2 if (B >= 16 and B % 16 == 0) else B
    assert B % BB == 0
    grid = (B // BB,)

    out_flat, hid, cell = pl.pallas_call(
        lstm_kernel,
        out_shape=(
            jax.ShapeDtypeStruct((B, T * H), x_bti.dtype),  # lane-dense output slab
            jax.ShapeDtypeStruct((B, H), x_bti.dtype),      # final hidden
            jax.ShapeDtypeStruct((B, H), x_bti.dtype),      # final cell
        ),
        grid_spec=pltpu.PrefetchScalarGridSpec(
            num_scalar_prefetch=0,
            grid=grid,
            in_specs=[
                pl.BlockSpec((T, BB, I), lambda nb: (0, nb, 0)),
                pl.BlockSpec((I, 4 * H), lambda nb: (0, 0)),
                pl.BlockSpec((H, 4 * H), lambda nb: (0, 0)),
                pl.BlockSpec((1, 4 * H), lambda nb: (0, 0)),
            ],
            out_specs=[
                pl.BlockSpec((BB, T * H), lambda nb: (nb, 0)),
                pl.BlockSpec((BB, H), lambda nb: (nb, 0)),
                pl.BlockSpec((BB, H), lambda nb: (nb, 0)),
            ],
            scratch_shapes=[pltpu.VMEM((T, BB, 4 * H), jnp.float32)],  # time-major wx
        ),
        compiler_params=pltpu.CompilerParams(
            dimension_semantics=("parallel",)),
    )(x_tbi, wih_t, whh_t, bias)

    output = out_flat.reshape(B, T, H)                     # contiguous reshape (free)
    hidden = hid[None]                                     # (1, B, H): num_layers*dirs = 1
    cellstate = cell[None]                                 # (1, B, H)
    return output, hidden, cellstate


def lstm_reference(x_bti, w_ih, w_hh, b_ih, b_hh):
    """Pure-JAX reference matching torch.nn.LSTM (1 layer, unidirectional)."""
    B, T, I = x_bti.shape
    H = w_hh.shape[1]

    def step(carry, x_t):
        h, c = carry
        gates = x_t @ w_ih.T + b_ih + h @ w_hh.T + b_hh
        i, f, g, o = jnp.split(gates, 4, axis=-1)
        i, f, o = jax.nn.sigmoid(i), jax.nn.sigmoid(f), jax.nn.sigmoid(o)
        g = jnp.tanh(g)
        c = f * c + i * g
        h = o * jnp.tanh(c)
        return (h, c), h

    init = (jnp.zeros((B, H), x_bti.dtype), jnp.zeros((B, H), x_bti.dtype))
    (h, c), ys = jax.lax.scan(step, init, jnp.transpose(x_bti, (1, 0, 2)))
    return jnp.transpose(ys, (1, 0, 2)), h[None], c[None]


if __name__ == "__main__":
    # Small shapes consistent with the module: input_size=2, hidden_size=32,
    # batch=8 (fills all 8 vreg sublanes; MXU rows are intentionally underfilled
    # at this latency-bound size), seq=8.
    B, T, I, H = 8, 8, 2, 32

    key = jax.random.PRNGKey(0)
    kx, kwi, kwh, kbi, kbh = jax.random.split(key, 5)

    x = jax.random.normal(kx, (B, T, I), dtype=jnp.float32)

    # Weights: uniform(-0.08, 0.08) as in EncoderRNN.__init__.
    w_ih = jax.random.uniform(kwi, (4 * H, I), minval=-0.08, maxval=0.08, dtype=jnp.float32)
    w_hh = jax.random.uniform(kwh, (4 * H, H), minval=-0.08, maxval=0.08, dtype=jnp.float32)
    # Biases keep the PyTorch default LSTM init: uniform(-1/sqrt(H), 1/sqrt(H)).
    bound = 1.0 / float(jnp.sqrt(jnp.float32(H)))
    b_ih = jax.random.uniform(kbi, (4 * H,), minval=-bound, maxval=bound, dtype=jnp.float32)
    b_hh = jax.random.uniform(kbh, (4 * H,), minval=-bound, maxval=bound, dtype=jnp.float32)

    out, hid, cell = encoder_rnn_forward(x, w_ih, w_hh, b_ih, b_hh)
    jax.block_until_ready((out, hid, cell))

    ref_out, ref_hid, ref_cell = lstm_reference(x, w_ih, w_hh, b_ih, b_hh)
    assert out.shape == (B, T, H) and hid.shape == (1, B, H) and cell.shape == (1, B, H)
    assert jnp.allclose(out, ref_out, atol=1e-5, rtol=1e-5)
    assert jnp.allclose(hid, ref_hid, atol=1e-5, rtol=1e-5)
    assert jnp.allclose(cell, ref_cell, atol=1e-5, rtol=1e-5)

    print("KERNEL_OK")
</pallas_src>

<mosaic_0001>
module attributes {stable_mosaic.version = 11 : i64} {
  func.func @lstm_kernel(%arg0: i32, %arg1: memref<8x8x2xf32, #tpu.memory_space<vmem>>, %arg2: memref<2x128xf32, #tpu.memory_space<vmem>>, %arg3: memref<32x128xf32, #tpu.memory_space<vmem>>, %arg4: memref<1x128xf32, #tpu.memory_space<vmem>>, %arg5: memref<8x256xf32, #tpu.memory_space<vmem>>, %arg6: memref<8x32xf32, #tpu.memory_space<vmem>>, %arg7: memref<8x32xf32, #tpu.memory_space<vmem>>, %arg8: memref<8x8x128xf32, #tpu.memory_space<vmem>>) attributes {dimension_semantics = [#tpu.dimension_semantics<parallel>], iteration_bounds = array<i64: 1>, scalar_prefetch = 0 : i64, scratch_operands = 1 : i64, tpu.core_type = #tpu.core_type<tc>, window_params = [{transform_indices = @transform_0, window_bounds = array<i64: 8, 8, 2>}, {pipeline_mode = #tpu.pipeline_mode<synchronous>, transform_indices = @transform_1, window_bounds = array<i64: 2, 128>}, {pipeline_mode = #tpu.pipeline_mode<synchronous>, transform_indices = @transform_2, window_bounds = array<i64: 32, 128>}, {pipeline_mode = #tpu.pipeline_mode<synchronous>, transform_indices = @transform_3, window_bounds = array<i64: 1, 128>}, {transform_indices = @transform_4, window_bounds = array<i64: 8, 256>}, {transform_indices = @transform_5, window_bounds = array<i64: 8, 32>}, {transform_indices = @transform_6, window_bounds = array<i64: 8, 32>}]} {
    %c0 = arith.constant 0 : index
    %c0_0 = arith.constant 0 : index
    %c0_1 = arith.constant 0 : index
    %0 = vector.load %arg1[%c0, %c0_0, %c0_1] : memref<8x8x2xf32, #tpu.memory_space<vmem>>, vector<8x8x2xf32>
    %c0_2 = arith.constant 0 : index
    %c0_3 = arith.constant 0 : index
    %1 = vector.load %arg2[%c0_2, %c0_3] : memref<2x128xf32, #tpu.memory_space<vmem>>, vector<2x128xf32>
    %c0_4 = arith.constant 0 : index
    %c0_5 = arith.constant 0 : index
    %2 = vector.load %arg4[%c0_4, %c0_5] : memref<1x128xf32, #tpu.memory_space<vmem>>, vector<1x128xf32>
    %3 = vector.shape_cast %2 : vector<1x128xf32> to vector<1x1x128xf32>
    %4 = vector.extract_strided_slice %0 {offsets = [0, 0, 0], sizes = [8, 8, 1], strides = [1, 1, 1]} : vector<8x8x2xf32> to vector<8x8x1xf32>
    %5 = vector.extract_strided_slice %1 {offsets = [0, 0], sizes = [1, 128], strides = [1, 1]} : vector<2x128xf32> to vector<1x128xf32>
    %6 = vector.shape_cast %5 : vector<1x128xf32> to vector<128xf32>
    %7 = vector.shape_cast %6 : vector<128xf32> to vector<1x1x128xf32>
    %8 = vector.broadcast %4 : vector<8x8x1xf32> to vector<8x8x128xf32>
    %9 = vector.broadcast %7 : vector<1x1x128xf32> to vector<8x8x128xf32>
    %10 = arith.mulf %8, %9 : vector<8x8x128xf32>
    %11 = vector.broadcast %3 : vector<1x1x128xf32> to vector<8x8x128xf32>
    %12 = arith.addf %11, %10 : vector<8x8x128xf32>
    %13 = vector.extract_strided_slice %0 {offsets = [0, 0, 1], sizes = [8, 8, 1], strides = [1, 1, 1]} : vector<8x8x2xf32> to vector<8x8x1xf32>
    %14 = vector.extract_strided_slice %1 {offsets = [1, 0], sizes = [1, 128], strides = [1, 1]} : vector<2x128xf32> to vector<1x128xf32>
    %15 = vector.shape_cast %14 : vector<1x128xf32> to vector<128xf32>
    %16 = vector.shape_cast %15 : vector<128xf32> to vector<1x1x128xf32>
    %17 = vector.broadcast %13 : vector<8x8x1xf32> to vector<8x8x128xf32>
    %18 = vector.broadcast %16 : vector<1x1x128xf32> to vector<8x8x128xf32>
    %19 = arith.mulf %17, %18 : vector<8x8x128xf32>
    %20 = arith.addf %12, %19 : vector<8x8x128xf32>
    %c0_6 = arith.constant 0 : index
    %c0_7 = arith.constant 0 : index
    %c0_8 = arith.constant 0 : index
    %21 = vector.load %arg8[%c0_6, %c0_7, %c0_8] : memref<8x8x128xf32, #tpu.memory_space<vmem>>, vector<8x8x128xf32>
    tpu.vector_store %arg8[%c0_6, %c0_7, %c0_8], %20 {strides = array<i32>} : memref<8x8x128xf32, #tpu.memory_space<vmem>>, vector<8x8x128xf32>,
    %c0_9 = arith.constant 0 : index
    %c0_10 = arith.constant 0 : index
    %22 = vector.load %arg3[%c0_9, %c0_10] : memref<32x128xf32, #tpu.memory_space<vmem>>, vector<32x128xf32>
    %23 = tpu.iota {dimensions = array<i32: 1>} : vector<8x128xi32>
    %c96_i32 = arith.constant 96 : i32
    %24 = vector.broadcast %c96_i32 : i32 to vector<8x128xi32>
    %25 = arith.cmpi slt, %23, %24 : vector<8x128xi32>
    %cst = arith.constant 0.000000e+00 : f32
    %26 = vector.broadcast %cst : f32 to vector<8x32xf32>
    %cst_11 = arith.constant 0.000000e+00 : f32
    %27 = vector.broadcast %cst_11 : f32 to vector<8x32xf32>
    %c0_12 = arith.constant 0 : index
    %c0_13 = arith.constant 0 : index
    %c0_14 = arith.constant 0 : index
    %28 = vector.load %arg8[%c0_12, %c0_13, %c0_14] : memref<8x8x128xf32, #tpu.memory_space<vmem>>, vector<1x8x128xf32>
    %29 = vector.shape_cast %28 : vector<1x8x128xf32> to vector<8x128xf32>
    %cst_15 = arith.constant dense<0.000000e+00> : vector<8x128xf32>
    %30 = tpu.matmul %26, %22, %cst_15 {dimension_numbers = #tpu.dot_dimension_numbers<[1], [0], [0], [1], [0, 0, 1, 1], [], []>} : vector<8x32xf32>, vector<32x128xf32>, vector<8x128xf32> -> vector<8x128xf32>
    %31 = arith.addf %29, %30 : vector<8x128xf32>
    %32 = arith.negf %31 : vector<8x128xf32>
    %33 = math.exp %32 : vector<8x128xf32>
    %cst_16 = arith.constant 1.000000e+00 : f32
    %34 = vector.broadcast %cst_16 : f32 to vector<8x128xf32>
    %35 = arith.addf %34, %33 : vector<8x128xf32>
    %36 = arith.divf %34, %35 : vector<8x128xf32>
    %37 = math.tanh %31 : vector<8x128xf32>
    %38 = arith.select %25, %36, %37 : vector<8x128xi1>, vector<8x128xf32>
    %39 = vector.extract_strided_slice %38 {offsets = [0, 0], sizes = [8, 32], strides = [1, 1]} : vector<8x128xf32> to vector<8x32xf32>
    %40 = vector.extract_strided_slice %38 {offsets = [0, 32], sizes = [8, 32], strides = [1, 1]} : vector<8x128xf32> to vector<8x32xf32>
    %41 = vector.extract_strided_slice %38 {offsets = [0, 64], sizes = [8, 32], strides = [1, 1]} : vector<8x128xf32> to vector<8x32xf32>
    %42 = vector.extract_strided_slice %38 {offsets = [0, 96], sizes = [8, 32], strides = [1, 1]} : vector<8x128xf32> to vector<8x32xf32>
    %43 = arith.mulf %40, %27 : vector<8x32xf32>
    %44 = arith.mulf %39, %42 : vector<8x32xf32>
    %45 = arith.addf %43, %44 : vector<8x32xf32>
    %46 = math.tanh %45 : vector<8x32xf32>
    %47 = arith.mulf %41, %46 : vector<8x32xf32>
    %c1 = arith.constant 1 : index
    %c0_17 = arith.constant 0 : index
    %c0_18 = arith.constant 0 : index
    %48 = vector.load %arg8[%c1, %c0_17, %c0_18] : memref<8x8x128xf32, #tpu.memory_space<vmem>>, vector<1x8x128xf32>
    %49 = vector.shape_cast %48 : vector<1x8x128xf32> to vector<8x128xf32>
    %cst_19 = arith.constant dense<0.000000e+00> : vector<8x128xf32>
    %50 = tpu.matmul %47, %22, %cst_19 {dimension_numbers = #tpu.dot_dimension_numbers<[1], [0], [0], [1], [0, 0, 1, 1], [], []>} : vector<8x32xf32>, vector<32x128xf32>, vector<8x128xf32> -> vector<8x128xf32>
    %51 = arith.addf %49, %50 : vector<8x128xf32>
    %52 = arith.negf %51 : vector<8x128xf32>
    %53 = math.exp %52 : vector<8x128xf32>
    %cst_20 = arith.constant 1.000000e+00 : f32
    %54 = vector.broadcast %cst_20 : f32 to vector<8x128xf32>
    %55 = arith.addf %54, %53 : vector<8x128xf32>
    %56 = arith.divf %54, %55 : vector<8x128xf32>
    %57 = math.tanh %51 : vector<8x128xf32>
    %58 = arith.select %25, %56, %57 : vector<8x128xi1>, vector<8x128xf32>
    %59 = vector.extract_strided_slice %58 {offsets = [0, 0], sizes = [8, 32], strides = [1, 1]} : vector<8x128xf32> to vector<8x32xf32>
    %60 = vector.extract_strided_slice %58 {offsets = [0, 32], sizes = [8, 32], strides = [1, 1]} : vector<8x128xf32> to vector<8x32xf32>
    %61 = vector.extract_strided_slice %58 {offsets = [0, 64], sizes = [8, 32], strides = [1, 1]} : vector<8x128xf32> to vector<8x32xf32>
    %62 = vector.extract_strided_slice %58 {offsets = [0, 96], sizes = [8, 32], strides = [1, 1]} : vector<8x128xf32> to vector<8x32xf32>
    %63 = arith.mulf %60, %45 : vector<8x32xf32>
    %64 = arith.mulf %59, %62 : vector<8x32xf32>
    %65 = arith.addf %63, %64 : vector<8x32xf32>
    %66 = math.tanh %65 : vector<8x32xf32>
    %67 = arith.mulf %61, %66 : vector<8x32xf32>
    %c2 = arith.constant 2 : index
    %c0_21 = arith.constant 0 : index
    %c0_22 = arith.constant 0 : index
    %68 = vector.load %arg8[%c2, %c0_21, %c0_22] : memref<8x8x128xf32, #tpu.memory_space<vmem>>, vector<1x8x128xf32>
    %69 = vector.shape_cast %68 : vector<1x8x128xf32> to vector<8x128xf32>
    %cst_23 = arith.constant dense<0.000000e+00> : vector<8x128xf32>
    %70 = tpu.matmul %67, %22, %cst_23 {dimension_numbers = #tpu.dot_dimension_numbers<[1], [0], [0], [1], [0, 0, 1, 1], [], []>} : vector<8x32xf32>, vector<32x128xf32>, vector<8x128xf32> -> vector<8x128xf32>
    %71 = arith.addf %69, %70 : vector<8x128xf32>
    %72 = arith.negf %71 : vector<8x128xf32>
    %73 = math.exp %72 : vector<8x128xf32>
    %cst_24 = arith.constant 1.000000e+00 : f32
    %74 = vector.broadcast %cst_24 : f32 to vector<8x128xf32>
    %75 = arith.addf %74, %73 : vector<8x128xf32>
    %76 = arith.divf %74, %75 : vector<8x128xf32>
    %77 = math.tanh %71 : vector<8x128xf32>
    %78 = arith.select %25, %76, %77 : vector<8x128xi1>, vector<8x128xf32>
    %79 = vector.extract_strided_slice %78 {offsets = [0, 0], sizes = [8, 32], strides = [1, 1]} : vector<8x128xf32> to vector<8x32xf32>
    %80 = vector.extract_strided_slice %78 {offsets = [0, 32], sizes = [8, 32], strides = [1, 1]} : vector<8x128xf32> to vector<8x32xf32>
    %81 = vector.extract_strided_slice %78 {offsets = [0, 64], sizes = [8, 32], strides = [1, 1]} : vector<8x128xf32> to vector<8x32xf32>
    %82 = vector.extract_strided_slice %78 {offsets = [0, 96], sizes = [8, 32], strides = [1, 1]} : vector<8x128xf32> to vector<8x32xf32>
    %83 = arith.mulf %80, %65 : vector<8x32xf32>
    %84 = arith.mulf %79, %82 : vector<8x32xf32>
    %85 = arith.addf %83, %84 : vector<8x32xf32>
    %86 = math.tanh %85 : vector<8x32xf32>
    %87 = arith.mulf %81, %86 : vector<8x32xf32>
    %c3 = arith.constant 3 : index
    %c0_25 = arith.constant 0 : index
    %c0_26 = arith.constant 0 : index
    %88 = vector.load %arg8[%c3, %c0_25, %c0_26] : memref<8x8x128xf32, #tpu.memory_space<vmem>>, vector<1x8x128xf32>
    %89 = vector.shape_cast %88 : vector<1x8x128xf32> to vector<8x128xf32>
    %cst_27 = arith.constant dense<0.000000e+00> : vector<8x128xf32>
    %90 = tpu.matmul %87, %22, %cst_27 {dimension_numbers = #tpu.dot_dimension_numbers<[1], [0], [0], [1], [0, 0, 1, 1], [], []>} : vector<8x32xf32>, vector<32x128xf32>, vector<8x128xf32> -> vector<8x128xf32>
    %91 = arith.addf %89, %90 : vector<8x128xf32>
    %92 = arith.negf %91 : vector<8x128xf32>
    %93 = math.exp %92 : vector<8x128xf32>
    %cst_28 = arith.constant 1.000000e+00 : f32
    %94 = vector.broadcast %cst_28 : f32 to vector<8x128xf32>
    %95 = arith.addf %94, %93 : vector<8x128xf32>
    %96 = arith.divf %94, %95 : vector<8x128xf32>
    %97 = math.tanh %91 : vector<8x128xf32>
    %98 = arith.select %25, %96, %97 : vector<8x128xi1>, vector<8x128xf32>
    %99 = vector.extract_strided_slice %98 {offsets = [0, 0], sizes = [8, 32], strides = [1, 1]} : vector<8x128xf32> to vector<8x32xf32>
    %100 = vector.extract_strided_slice %98 {offsets = [0, 32], sizes = [8, 32], strides = [1, 1]} : vector<8x128xf32> to vector<8x32xf32>
    %101 = vector.extract_strided_slice %98 {offsets = [0, 64], sizes = [8, 32], strides = [1, 1]} : vector<8x128xf32> to vector<8x32xf32>
    %102 = vector.extract_strided_slice %98 {offsets = [0, 96], sizes = [8, 32], strides = [1, 1]} : vector<8x128xf32> to vector<8x32xf32>
    %103 = arith.mulf %100, %85 : vector<8x32xf32>
    %104 = arith.mulf %99, %102 : vector<8x32xf32>
    %105 = arith.addf %103, %104 : vector<8x32xf32>
    %106 = math.tanh %105 : vector<8x32xf32>
    %107 = arith.mulf %101, %106 : vector<8x32xf32>
    %108 = tpu.concatenate %47, %67, %87, %107 in 1 : vector<8x32xf32>, vector<8x32xf32>, vector<8x32xf32>, vector<8x32xf32> -> vector<8x128xf32>
    %c0_29 = arith.constant 0 : index
    %c0_30 = arith.constant 0 : index
    %109 = vector.load %arg5[%c0_29, %c0_30] : memref<8x256xf32, #tpu.memory_space<vmem>>, vector<8x128xf32>
    tpu.vector_store %arg5[%c0_29, %c0_30], %108 {strides = array<i32>} : memref<8x256xf32, #tpu.memory_space<vmem>>, vector<8x128xf32>,
    %c4 = arith.constant 4 : index
    %c0_31 = arith.constant 0 : index
    %c0_32 = arith.constant 0 : index
    %110 = vector.load %arg8[%c4, %c0_31, %c0_32] : memref<8x8x128xf32, #tpu.memory_space<vmem>>, vector<1x8x128xf32>
    %111 = vector.shape_cast %110 : vector<1x8x128xf32> to vector<8x128xf32>
    %cst_33 = arith.constant dense<0.000000e+00> : vector<8x128xf32>
    %112 = tpu.matmul %107, %22, %cst_33 {dimension_numbers = #tpu.dot_dimension_numbers<[1], [0], [0], [1], [0, 0, 1, 1], [], []>} : vector<8x32xf32>, vector<32x128xf32>, vector<8x128xf32> -> vector<8x128xf32>
    %113 = arith.addf %111, %112 : vector<8x128xf32>
    %114 = arith.negf %113 : vector<8x128xf32>
    %115 = math.exp %114 : vector<8x128xf32>
    %cst_34 = arith.constant 1.000000e+00 : f32
    %116 = vector.broadcast %cst_34 : f32 to vector<8x128xf32>
    %117 = arith.addf %116, %115 : vector<8x128xf32>
    %118 = arith.divf %116, %117 : vector<8x128xf32>
    %119 = math.tanh %113 : vector<8x128xf32>
    %120 = arith.select %25, %118, %119 : vector<8x128xi1>, vector<8x128xf32>
    %121 = vector.extract_strided_slice %120 {offsets = [0, 0], sizes = [8, 32], strides = [1, 1]} : vector<8x128xf32> to vector<8x32xf32>
    %122 = vector.extract_strided_slice %120 {offsets = [0, 32], sizes = [8, 32], strides = [1, 1]} : vector<8x128xf32> to vector<8x32xf32>
    %123 = vector.extract_strided_slice %120 {offsets = [0, 64], sizes = [8, 32], strides = [1, 1]} : vector<8x128xf32> to vector<8x32xf32>
    %124 = vector.extract_strided_slice %120 {offsets = [0, 96], sizes = [8, 32], strides = [1, 1]} : vector<8x128xf32> to vector<8x32xf32>
    %125 = arith.mulf %122, %105 : vector<8x32xf32>
    %126 = arith.mulf %121, %124 : vector<8x32xf32>
    %127 = arith.addf %125, %126 : vector<8x32xf32>
    %128 = math.tanh %127 : vector<8x32xf32>
    %129 = arith.mulf %123, %128 : vector<8x32xf32>
    %c5 = arith.constant 5 : index
    %c0_35 = arith.constant 0 : index
    %c0_36 = arith.constant 0 : index
    %130 = vector.load %arg8[%c5, %c0_35, %c0_36] : memref<8x8x128xf32, #tpu.memory_space<vmem>>, vector<1x8x128xf32>
    %131 = vector.shape_cast %130 : vector<1x8x128xf32> to vector<8x128xf32>
    %cst_37 = arith.constant dense<0.000000e+00> : vector<8x128xf32>
    %132 = tpu.matmul %129, %22, %cst_37 {dimension_numbers = #tpu.dot_dimension_numbers<[1], [0], [0], [1], [0, 0, 1, 1], [], []>} : vector<8x32xf32>, vector<32x128xf32>, vector<8x128xf32> -> vector<8x128xf32>
    %133 = arith.addf %131, %132 : vector<8x128xf32>
    %134 = arith.negf %133 : vector<8x128xf32>
    %135 = math.exp %134 : vector<8x128xf32>
    %cst_38 = arith.constant 1.000000e+00 : f32
    %136 = vector.broadcast %cst_38 : f32 to vector<8x128xf32>
    %137 = arith.addf %136, %135 : vector<8x128xf32>
    %138 = arith.divf %136, %137 : vector<8x128xf32>
    %139 = math.tanh %133 : vector<8x128xf32>
    %140 = arith.select %25, %138, %139 : vector<8x128xi1>, vector<8x128xf32>
    %141 = vector.extract_strided_slice %140 {offsets = [0, 0], sizes = [8, 32], strides = [1, 1]} : vector<8x128xf32> to vector<8x32xf32>
    %142 = vector.extract_strided_slice %140 {offsets = [0, 32], sizes = [8, 32], strides = [1, 1]} : vector<8x128xf32> to vector<8x32xf32>
    %143 = vector.extract_strided_slice %140 {offsets = [0, 64], sizes = [8, 32], strides = [1, 1]} : vector<8x128xf32> to vector<8x32xf32>
    %144 = vector.extract_strided_slice %140 {offsets = [0, 96], sizes = [8, 32], strides = [1, 1]} : vector<8x128xf32> to vector<8x32xf32>
    %145 = arith.mulf %142, %127 : vector<8x32xf32>
    %146 = arith.mulf %141, %144 : vector<8x32xf32>
    %147 = arith.addf %145, %146 : vector<8x32xf32>
    %148 = math.tanh %147 : vector<8x32xf32>
    %149 = arith.mulf %143, %148 : vector<8x32xf32>
    %c6 = arith.constant 6 : index
    %c0_39 = arith.constant 0 : index
    %c0_40 = arith.constant 0 : index
    %150 = vector.load %arg8[%c6, %c0_39, %c0_40] : memref<8x8x128xf32, #tpu.memory_space<vmem>>, vector<1x8x128xf32>
    %151 = vector.shape_cast %150 : vector<1x8x128xf32> to vector<8x128xf32>
    %cst_41 = arith.constant dense<0.000000e+00> : vector<8x128xf32>
    %152 = tpu.matmul %149, %22, %cst_41 {dimension_numbers = #tpu.dot_dimension_numbers<[1], [0], [0], [1], [0, 0, 1, 1], [], []>} : vector<8x32xf32>, vector<32x128xf32>, vector<8x128xf32> -> vector<8x128xf32>
    %153 = arith.addf %151, %152 : vector<8x128xf32>
    %154 = arith.negf %153 : vector<8x128xf32>
    %155 = math.exp %154 : vector<8x128xf32>
    %cst_42 = arith.constant 1.000000e+00 : f32
    %156 = vector.broadcast %cst_42 : f32 to vector<8x128xf32>
    %157 = arith.addf %156, %155 : vector<8x128xf32>
    %158 = arith.divf %156, %157 : vector<8x128xf32>
    %159 = math.tanh %153 : vector<8x128xf32>
    %160 = arith.select %25, %158, %159 : vector<8x128xi1>, vector<8x128xf32>
    %161 = vector.extract_strided_slice %160 {offsets = [0, 0], sizes = [8, 32], strides = [1, 1]} : vector<8x128xf32> to vector<8x32xf32>
    %162 = vector.extract_strided_slice %160 {offsets = [0, 32], sizes = [8, 32], strides = [1, 1]} : vector<8x128xf32> to vector<8x32xf32>
    %163 = vector.extract_strided_slice %160 {offsets = [0, 64], sizes = [8, 32], strides = [1, 1]} : vector<8x128xf32> to vector<8x32xf32>
    %164 = vector.extract_strided_slice %160 {offsets = [0, 96], sizes = [8, 32], strides = [1, 1]} : vector<8x128xf32> to vector<8x32xf32>
    %165 = arith.mulf %162, %147 : vector<8x32xf32>
    %166 = arith.mulf %161, %164 : vector<8x32xf32>
    %167 = arith.addf %165, %166 : vector<8x32xf32>
    %168 = math.tanh %167 : vector<8x32xf32>
    %169 = arith.mulf %163, %168 : vector<8x32xf32>
    %c7 = arith.constant 7 : index
    %c0_43 = arith.constant 0 : index
    %c0_44 = arith.constant 0 : index
    %170 = vector.load %arg8[%c7, %c0_43, %c0_44] : memref<8x8x128xf32, #tpu.memory_space<vmem>>, vector<1x8x128xf32>
    %171 = vector.shape_cast %170 : vector<1x8x128xf32> to vector<8x128xf32>
    %cst_45 = arith.constant dense<0.000000e+00> : vector<8x128xf32>
    %172 = tpu.matmul %169, %22, %cst_45 {dimension_numbers = #tpu.dot_dimension_numbers<[1], [0], [0], [1], [0, 0, 1, 1], [], []>} : vector<8x32xf32>, vector<32x128xf32>, vector<8x128xf32> -> vector<8x128xf32>
    %173 = arith.addf %171, %172 : vector<8x128xf32>
    %174 = arith.negf %173 : vector<8x128xf32>
    %175 = math.exp %174 : vector<8x128xf32>
    %cst_46 = arith.constant 1.000000e+00 : f32
    %176 = vector.broadcast %cst_46 : f32 to vector<8x128xf32>
    %177 = arith.addf %176, %175 : vector<8x128xf32>
    %178 = arith.divf %176, %177 : vector<8x128xf32>
    %179 = math.tanh %173 : vector<8x128xf32>
    %180 = arith.select %25, %178, %179 : vector<8x128xi1>, vector<8x128xf32>
    %181 = vector.extract_strided_slice %180 {offsets = [0, 0], sizes = [8, 32], strides = [1, 1]} : vector<8x128xf32> to vector<8x32xf32>
    %182 = vector.extract_strided_slice %180 {offsets = [0, 32], sizes = [8, 32], strides = [1, 1]} : vector<8x128xf32> to vector<8x32xf32>
    %183 = vector.extract_strided_slice %180 {offsets = [0, 64], sizes = [8, 32], strides = [1, 1]} : vector<8x128xf32> to vector<8x32xf32>
    %184 = vector.extract_strided_slice %180 {offsets = [0, 96], sizes = [8, 32], strides = [1, 1]} : vector<8x128xf32> to vector<8x32xf32>
    %185 = arith.mulf %182, %167 : vector<8x32xf32>
    %186 = arith.mulf %181, %184 : vector<8x32xf32>
    %187 = arith.addf %185, %186 : vector<8x32xf32>
    %188 = math.tanh %187 : vector<8x32xf32>
    %189 = arith.mulf %183, %188 : vector<8x32xf32>
    %190 = tpu.concatenate %129, %149, %169, %189 in 1 : vector<8x32xf32>, vector<8x32xf32>, vector<8x32xf32>, vector<8x32xf32> -> vector<8x128xf32>
    %c0_47 = arith.constant 0 : index
    %c128 = arith.constant 128 : index
    %191 = vector.load %arg5[%c0_47, %c128] : memref<8x256xf32, #tpu.memory_space<vmem>>, vector<8x128xf32>
    tpu.vector_store %arg5[%c0_47, %c128], %190 {strides = array<i32>} : memref<8x256xf32, #tpu.memory_space<vmem>>, vector<8x128xf32>,
    %c0_48 = arith.constant 0 : index
    %c0_49 = arith.constant 0 : index
    %192 = vector.load %arg6[%c0_48, %c0_49] : memref<8x32xf32, #tpu.memory_space<vmem>>, vector<8x32xf32>
    tpu.vector_store %arg6[%c0_48, %c0_49], %189 {strides = array<i32>} : memref<8x32xf32, #tpu.memory_space<vmem>>, vector<8x32xf32>,
    %c0_50 = arith.constant 0 : index
    %c0_51 = arith.constant 0 : index
    %193 = vector.load %arg7[%c0_50, %c0_51] : memref<8x32xf32, #tpu.memory_space<vmem>>, vector<8x32xf32>
    tpu.vector_store %arg7[%c0_50, %c0_51], %187 {strides = array<i32>} : memref<8x32xf32, #tpu.memory_space<vmem>>, vector<8x32xf32>,
    return
  }
  func.func @transform_0(%arg0: i32) -> (i32, i32, i32) {
    %c0_i32 = arith.constant 0 : i32
    %c0_i32_0 = arith.constant 0 : i32
    %c0_i32_1 = arith.constant 0 : i32
    return %c0_i32, %arg0, %c0_i32_0 : i32, i32, i32
  }
  func.func @transform_1(%arg0: i32) -> (i32, i32) {
    %c0_i32 = arith.constant 0 : i32
    %c0_i32_0 = arith.constant 0 : i32
    %c0_i32_1 = arith.constant 0 : i32
    return %c0_i32, %c0_i32_0 : i32, i32
  }
  func.func @transform_2(%arg0: i32) -> (i32, i32) {
    %c0_i32 = arith.constant 0 : i32
    %c0_i32_0 = arith.constant 0 : i32
    %c0_i32_1 = arith.constant 0 : i32
    return %c0_i32, %c0_i32_0 : i32, i32
  }
  func.func @transform_3(%arg0: i32) -> (i32, i32) {
    %c0_i32 = arith.constant 0 : i32
    %c0_i32_0 = arith.constant 0 : i32
    %c0_i32_1 = arith.constant 0 : i32
    return %c0_i32, %c0_i32_0 : i32, i32
  }
  func.func @transform_4(%arg0: i32) -> (i32, i32) {
    %c0_i32 = arith.constant 0 : i32
    %c0_i32_0 = arith.constant 0 : i32
    return %arg0, %c0_i32 : i32, i32
  }
  func.func @transform_5(%arg0: i32) -> (i32, i32) {
    %c0_i32 = arith.constant 0 : i32
    %c0_i32_0 = arith.constant 0 : i32
    return %arg0, %c0_i32 : i32, i32
  }
  func.func @transform_6(%arg0: i32) -> (i32, i32) {
    %c0_i32 = arith.constant 0 : i32
    %c0_i32_0 = arith.constant 0 : i32
    return %arg0, %c0_i32 : i32, i32
  }
}

</mosaic_0001>

<llo_original>
// kernel: tpu_custom_call.1
$region0: #{tpu_custom_call.1}
  #allocation0 [shape = 'u32[]', space=smem, size = 0x4, offset = 0x4, fixed_abs, tag = 'smem constant byte address 0x4 - core index']
  #allocation1 [shape = 'u32[144,128]{1,0:T(1,128)}', space=vmem, size = 0x12000, scoped, tag = 'internal scratch']
  #allocation2 [shape = 'f32[8,8,128]{2,1,0:T(8,128)}', space=vmem, size = 0x8000, scoped, tag = 'scratch operand']
  %s0 = inlined_call_operand.vmem [shape: f32[8,8,2], index: 0, kind: input, shape index: {}]
  %s1 = inlined_call_operand.vmem [shape: f32[2,128], index: 1, kind: input, shape index: {}]
  %s2 = inlined_call_operand.vmem [shape: f32[32,128], index: 2, kind: input, shape index: {}]
  %s3 = inlined_call_operand.vmem [shape: f32[1,128], index: 3, kind: input, shape index: {}]
  %s4 = inlined_call_operand.hbm [shape: f32[8,256], index: 4, kind: output, shape index: {0}]
  %s5 = inlined_call_operand.hbm [shape: f32[8,32], index: 5, kind: output, shape index: {1}]
  %s6 = inlined_call_operand.hbm [shape: f32[8,32], index: 6, kind: output, shape index: {2}]
  %7 = xla_tuple %s4, %s5, %s6
  %s8 = sld [smem:[#allocation0]]
  $region42: #{tpu_custom_call.1} parent=0
    _
  %s10 = ssub.s32 1, %s8
  %s11 = scalar_select 0, %s10, %s8
  $region1: #{tpu_custom_call.1} parent=0
    #allocation3 [shape = 'u8[8192]{0}', space=vmem, size = 0x2000, scoped, tag = 'output window, operand 0, single buffered']
    #allocation4 [shape = 's32[1]{0}', space=sflag, size = 0x4, scoped, tag = 'scoped memory for tpu_custom_call.1']
    #allocation5 [shape = 'u8[4096]{0}', space=vmem, size = 0x1000, scoped, tag = 'output window, operand 1, single buffered']
    #allocation6 [shape = 's32[1]{0}', space=sflag, size = 0x4, scoped, tag = 'scoped memory for tpu_custom_call.1']
    #allocation7 [shape = 'u8[4096]{0}', space=vmem, size = 0x1000, scoped, tag = 'output window, operand 2, single buffered']
    %12 = vsyncpa [#allocation4], 0
    %13 = vsyncpa [#allocation6], 0
    // Predicated region
    $region2: #{tpu_custom_call.1} parent=1 // pred_check
      _
    $region3: #{tpu_custom_call.1} parent=1 // pred_check_branch
      %15 = sbr.rel (0) target = $region5
    $region4: #{tpu_custom_call.1} parent=1 // pred_region
      _
    $region5: #{tpu_custom_call.1} parent=1 // pred_fallthru
      _
    // Predicated region
    $region6: #{tpu_custom_call.1} parent=1 // pred_check
      _
    $region7: #{tpu_custom_call.1} parent=1 // pred_check_branch
      %17 = sbr.rel (0) target = $region9
    $region8: #{tpu_custom_call.1} parent=1 // pred_region
      _
    $region9: #{tpu_custom_call.1} parent=1 // pred_fallthru
      _
    // Predicated region
    $region10: #{tpu_custom_call.1} parent=1 // pred_check
      _
    $region11: #{tpu_custom_call.1} parent=1 // pred_check_branch
      %19 = sbr.rel (0) target = $region13
    $region12: #{tpu_custom_call.1} parent=1 // pred_region
      _
    $region13: #{tpu_custom_call.1} parent=1 // pred_fallthru
      _
    // Predicated region
    $region14: #{tpu_custom_call.1} parent=1 // pred_check
      _
    $region15: #{tpu_custom_call.1} parent=1 // pred_check_branch
      %21 = sbr.rel (0) target = $region17
    $region16: #{tpu_custom_call.1} parent=1 // pred_region
      _
    $region17: #{tpu_custom_call.1} parent=1 // pred_fallthru
      _
    %v22 = vld [vmem:[%s0] sm:$0xff]
    %v23 = vld [vmem:[%s0 + $0x8] sm:$0xff]
    %v24 = vld [vmem:[%s0 + $0x10] sm:$0xff]
    %v25 = vld [vmem:[%s0 + $0x18] sm:$0xff]
    %v26 = vld [vmem:[%s0 + $0x20] sm:$0xff]
    %v27 = vld [vmem:[%s0 + $0x28] sm:$0xff]
    %v28 = vld [vmem:[%s0 + $0x30] sm:$0xff]
    %v29 = vld [vmem:[%s0 + $0x38] sm:$0xff]
    %v30 = vld [vmem:[%s1] sm:$0x3]
    %v31 = vld [vmem:[%s3] sm:$0x1]
    %33 = vset.pattern.permute.xlu0 0
    %34 = vperm.xlu0 %33, %v22
    %v35 = vpop.permute.xlu0 %34
    %38 = vset.pattern.permute.xlu0 0
    %39 = vperm.xlu0 %38, %v23
    %v40 = vpop.permute.xlu0 %39
    %43 = vset.pattern.permute.xlu0 0
    %44 = vperm.xlu0 %43, %v24
    %v45 = vpop.permute.xlu0 %44
    %48 = vset.pattern.permute.xlu0 0
    %49 = vperm.xlu0 %48, %v25
    %v50 = vpop.permute.xlu0 %49
    %53 = vset.pattern.permute.xlu0 0
    %54 = vperm.xlu0 %53, %v26
    %v55 = vpop.permute.xlu0 %54
    %58 = vset.pattern.permute.xlu0 0
    %59 = vperm.xlu0 %58, %v27
    %v60 = vpop.permute.xlu0 %59
    %63 = vset.pattern.permute.xlu0 0
    %64 = vperm.xlu0 %63, %v28
    %v65 = vpop.permute.xlu0 %64
    %68 = vset.pattern.permute.xlu0 0
    %69 = vperm.xlu0 %68, %v29
    %v70 = vpop.permute.xlu0 %69
    %v72 = vlaneseq
    %v73 = vshrl.u32 %v72, 7
    %v74 = vsub.s32 0, %v73
    %v75 = vrot.slane %v30, %v74
    %v76 = vmul.f32 %v35, %v75
    %v77 = vmul.f32 %v40, %v75
    %v78 = vmul.f32 %v45, %v75
    %v79 = vmul.f32 %v50, %v75
    %v80 = vmul.f32 %v55, %v75
    %v81 = vmul.f32 %v60, %v75
    %v82 = vmul.f32 %v65, %v75
    %v83 = vmul.f32 %v70, %v75
    %v85 = vlaneseq
    %v86 = vshrl.u32 %v85, 7
    %v87 = vsub.s32 0, %v86
    %v88 = vrot.slane %v31, %v87
    %v90 = vadd.f32 %v88, %v76
    %v91 = vadd.f32 %v88, %v77
    %v92 = vadd.f32 %v88, %v78
    %v93 = vadd.f32 %v88, %v79
    %v94 = vadd.f32 %v88, %v80
    %v95 = vadd.f32 %v88, %v81
    %v96 = vadd.f32 %v88, %v82
    %v97 = vadd.f32 %v88, %v83
    %98 = vset.pattern.permute.xlu0 1
    %99 = vperm.xlu0 %98, %v22
    %v100 = vpop.permute.xlu0 %99
    %102 = vset.pattern.permute.xlu0 1
    %103 = vperm.xlu0 %102, %v23
    %v104 = vpop.permute.xlu0 %103
    %106 = vset.pattern.permute.xlu0 1
    %107 = vperm.xlu0 %106, %v24
    %v108 = vpop.permute.xlu0 %107
    %110 = vset.pattern.permute.xlu0 1
    %111 = vperm.xlu0 %110, %v25
    %v112 = vpop.permute.xlu0 %111
    %114 = vset.pattern.permute.xlu0 1
    %115 = vperm.xlu0 %114, %v26
    %v116 = vpop.permute.xlu0 %115
    %118 = vset.pattern.permute.xlu0 1
    %119 = vperm.xlu0 %118, %v27
    %v120 = vpop.permute.xlu0 %119
    %122 = vset.pattern.permute.xlu0 1
    %123 = vperm.xlu0 %122, %v28
    %v124 = vpop.permute.xlu0 %123
    %126 = vset.pattern.permute.xlu0 1
    %127 = vperm.xlu0 %126, %v29
    %v128 = vpop.permute.xlu0 %127
    %v130 = vlaneseq
    %v131 = vshrl.u32 %v130, 7
    %v132 = vsub.s32 1, %v131
    %v133 = vrot.slane %v30, %v132
    %v134 = vmul.f32 %v100, %v133
    %v135 = vmul.f32 %v104, %v133
    %v136 = vmul.f32 %v108, %v133
    %v137 = vmul.f32 %v112, %v133
    %v138 = vmul.f32 %v116, %v133
    %v139 = vmul.f32 %v120, %v133
    %v140 = vmul.f32 %v124, %v133
    %v141 = vmul.f32 %v128, %v133
    %v142 = vadd.f32 %v90, %v134
    %v143 = vadd.f32 %v91, %v135
    %v144 = vadd.f32 %v92, %v136
    %v145 = vadd.f32 %v93, %v137
    %v146 = vadd.f32 %v94, %v138
    %v147 = vadd.f32 %v95, %v139
    %v148 = vadd.f32 %v96, %v140
    %v149 = vadd.f32 %v97, %v141
    %150 = vst [vmem:[#allocation2] sm:$0xff] %v142
    %151 = vst [vmem:[#allocation2 + $0x8] sm:$0xff] %v143
    %152 = vst [vmem:[#allocation2 + $0x10] sm:$0xff] %v144
    %153 = vst [vmem:[#allocation2 + $0x18] sm:$0xff] %v145
    %154 = vst [vmem:[#allocation2 + $0x20] sm:$0xff] %v146
    %155 = vst [vmem:[#allocation2 + $0x28] sm:$0xff] %v147
    %156 = vst [vmem:[#allocation2 + $0x30] sm:$0xff] %v148
    %157 = vst [vmem:[#allocation2 + $0x38] sm:$0xff] %v149
    %v158 = vld [vmem:[%s2] sm:$0xff]
    %v159 = vld [vmem:[%s2 + $0x8] sm:$0xff]
    %v160 = vld [vmem:[%s2 + $0x10] sm:$0xff]
    %v161 = vld [vmem:[%s2 + $0x18] sm:$0xff]
    %v162 = vlaneseq
    %v163 = vand.u32 %v162, 127
    %vm164 = vcmp.lt.s32.totalorder %v163, 96
    %v165 = vld [vmem:[#allocation2] sm:$0xff]
    %vm166 = vcmask 261120
    %v168 = vsel %vm166, 0.0, 0
    %170 = vmatprep.subr.mxu0 0.0
    %171 = vmatpush1.msra.mxu0 %v158
    %172 = vmatprep.subr.mxu0 0.0
    %173 = vmatpush1.msra.mxu0 %v159
    %174 = vmatprep.subr.mxu0 0.0
    %175 = vmatpush1.msra.mxu0 %v160
    %176 = vmatprep.subr.mxu0 0.0
    %177 = vmatpush1.msra.mxu0 %v161
    %178 = vmatprep.subr.mxu0 0.0
    %179 = vmatpush1.msra.mxu0 0.0
    %180 = vmatprep.subr.mxu0 0.0
    %181 = vmatpush1.msra.mxu0 0.0
    %182 = vmatprep.subr.mxu0 0.0
    %183 = vmatpush1.msra.mxu0 0.0
    %184 = vmatprep.subr.mxu0 0.0
    %185 = vmatpush1.msra.mxu0 0.0
    %186 = vmatprep.subr.mxu0 0.0
    %187 = vmatpush1.msra.mxu0 0.0
    %188 = vmatprep.subr.mxu0 0.0
    %189 = vmatpush1.msra.mxu0 0.0
    %190 = vmatprep.subr.mxu0 0.0
    %191 = vmatpush1.msra.mxu0 0.0
    %192 = vmatprep.subr.mxu0 0.0
    %193 = vmatpush1.msra.mxu0 0.0
    %194 = vmatprep.subr.mxu0 0.0
    %195 = vmatpush1.msra.mxu0 0.0
    %196 = vmatprep.subr.mxu0 0.0
    %197 = vmatpush1.msra.mxu0 0.0
    %198 = vmatprep.subr.mxu0 0.0
    %199 = vmatpush1.msra.mxu0 0.0
    %200 = vmatprep.subr.mxu0 0.0
    %201 = vmatpush1.msra.mxu0 0.0
    %202 = vmatprep.subr.mxu0 0.0
    %203 = vmatpush1.msra.mxu0 0.0
    %204 = vmatprep.subr.mxu0 0.0
    %205 = vmatpush1.msra.mxu0 0.0
    %206 = vmatprep.subr.mxu0 0.0
    %207 = vmatpush1.msra.mxu0 0.0
    %208 = vmatprep.subr.mxu0 0.0
    %209 = vmatpush1.msra.mxu0 0.0
    %210 = vmatprep.subr.mxu0 0.0
    %211 = vmatpush1.msra.mxu0 0.0
    %212 = vmatprep.subr.mxu0 0.0
    %213 = vmatpush1.msra.mxu0 0.0
    %214 = vmatprep.subr.mxu0 0.0
    %215 = vmatpush1.msra.mxu0 0.0
    %216 = vmatprep.subr.mxu0 0.0
    %217 = vmatpush1.msra.mxu0 0.0
    %218 = vmatprep.subr.mxu0 0.0
    %219 = vmatpush1.msra.mxu0 0.0
    %220 = vmatprep.subr.mxu0 0.0
    %221 = vmatpush1.msra.mxu0 0.0
    %222 = vmatprep.subr.mxu0 0.0
    %223 = vmatpush1.msra.mxu0 0.0
    %224 = vmatprep.subr.mxu0 0.0
    %225 = vmatpush1.msra.mxu0 0.0
    %226 = vmatprep.subr.mxu0 0.0
    %227 = vmatpush1.msra.mxu0 0.0
    %228 = vmatprep.subr.mxu0 0.0
    %229 = vmatpush1.msra.mxu0 0.0
    %230 = vmatprep.subr.mxu0 0.0
    %231 = vmatpush1.msra.mxu0 0.0
    %232 = vmatprep.subr.mxu0 0.0
    %233 = vmatpush1.msra.mxu0 0.0
    %234 = vmatprep.mubr.f32.mxu0 0.0
    %235 = vmatmul.mubr.f32.gmra.mrb[0].mxu0 %v168
    %v236 = vpop.f32.mrb[0].mxu0
    %v237 = vadd.f32 0.0, %v236
    %v238 = vpop.f32.mrb[0].mxu0
    %239 = vdwg.mxu0
    %v240 = vadd.f32 %v165, %v237
    %v241 = vxor.u32 %v240, 2147483648
    %v242 = vmul.f32 %v241, 1.442695
    %v243 = vpow.pop %v242
    %v244 = vadd.f32 %v243, 1.0
    %v245 = vrcp.pop %v244
    %v246 = vmul.f32 1.0, %v245
    %v247 = vtanh.pop %v240
    %v248 = vsel %vm164, %v246, %v247
    %v249 = vmul.f32 %v248, 0.0
    %251 = vrot.lane.b32.xlu0 %v248, 32
    %v252 = vpop.permute.xlu0 %251
    %v254 = vmul.f32 %v248, %v252
    %256 = vrot.lane.b32.xlu0 %v254, 32
    %v257 = vpop.permute.xlu0 %256
    %v259 = vadd.f32 %v249, %v257
    %v260 = vtanh.pop %v259
    %262 = vrot.lane.b32.xlu0 %v260, 32
    %v263 = vpop.permute.xlu0 %262
    %v265 = vmul.f32 %v248, %v263
    %s266 = scalar_lea.vmem [#allocation2], 8
    %v267 = vld [vmem:[%s266] sm:$0xff]
    %269 = vrot.lane.b32.xlu0 %v265, 64
    %v270 = vpop.permute.xlu0 %269
    %v271 = vsel %vm166, %v270, 0
    %273 = vmatprep.subr.mxu0 0.0
    %274 = vmatpush1.msra.mxu0 %v158
    %275 = vmatprep.subr.mxu0 0.0
    %276 = vmatpush1.msra.mxu0 %v159
    %277 = vmatprep.subr.mxu0 0.0
    %278 = vmatpush1.msra.mxu0 %v160
    %279 = vmatprep.subr.mxu0 0.0
    %280 = vmatpush1.msra.mxu0 %v161
    %281 = vmatprep.subr.mxu0 0.0
    %282 = vmatpush1.msra.mxu0 0.0
    %283 = vmatprep.subr.mxu0 0.0
    %284 = vmatpush1.msra.mxu0 0.0
    %285 = vmatprep.subr.mxu0 0.0
    %286 = vmatpush1.msra.mxu0 0.0
    %287 = vmatprep.subr.mxu0 0.0
    %288 = vmatpush1.msra.mxu0 0.0
    %289 = vmatprep.subr.mxu0 0.0
    %290 = vmatpush1.msra.mxu0 0.0
    %291 = vmatprep.subr.mxu0 0.0
    %292 = vmatpush1.msra.mxu0 0.0
    %293 = vmatprep.subr.mxu0 0.0
    %294 = vmatpush1.msra.mxu0 0.0
    %295 = vmatprep.subr.mxu0 0.0
    %296 = vmatpush1.msra.mxu0 0.0
    %297 = vmatprep.subr.mxu0 0.0
    %298 = vmatpush1.msra.mxu0 0.0
    %299 = vmatprep.subr.mxu0 0.0
    %300 = vmatpush1.msra.mxu0 0.0
    %301 = vmatprep.subr.mxu0 0.0
    %302 = vmatpush1.msra.mxu0 0.0
    %303 = vmatprep.subr.mxu0 0.0
    %304 = vmatpush1.msra.mxu0 0.0
    %305 = vmatprep.subr.mxu0 0.0
    %306 = vmatpush1.msra.mxu0 0.0
    %307 = vmatprep.subr.mxu0 0.0
    %308 = vmatpush1.msra.mxu0 0.0
    %309 = vmatprep.subr.mxu0 0.0
    %310 = vmatpush1.msra.mxu0 0.0
    %311 = vmatprep.subr.mxu0 0.0
    %312 = vmatpush1.msra.mxu0 0.0
    %313 = vmatprep.subr.mxu0 0.0
    %314 = vmatpush1.msra.mxu0 0.0
    %315 = vmatprep.subr.mxu0 0.0
    %316 = vmatpush1.msra.mxu0 0.0
    %317 = vmatprep.subr.mxu0 0.0
    %318 = vmatpush1.msra.mxu0 0.0
    %319 = vmatprep.subr.mxu0 0.0
    %320 = vmatpush1.msra.mxu0 0.0
    %321 = vmatprep.subr.mxu0 0.0
    %322 = vmatpush1.msra.mxu0 0.0
    %323 = vmatprep.subr.mxu0 0.0
    %324 = vmatpush1.msra.mxu0 0.0
    %325 = vmatprep.subr.mxu0 0.0
    %326 = vmatpush1.msra.mxu0 0.0
    %327 = vmatprep.subr.mxu0 0.0
    %328 = vmatpush1.msra.mxu0 0.0
    %329 = vmatprep.subr.mxu0 0.0
    %330 = vmatpush1.msra.mxu0 0.0
    %331 = vmatprep.subr.mxu0 0.0
    %332 = vmatpush1.msra.mxu0 0.0
    %333 = vmatprep.subr.mxu0 0.0
    %334 = vmatpush1.msra.mxu0 0.0
    %335 = vmatprep.subr.mxu0 0.0
    %336 = vmatpush1.msra.mxu0 0.0
    %337 = vmatprep.mubr.f32.mxu0 0.0
    %338 = vmatmul.mubr.f32.gmra.mrb[0].mxu0 %v271
    %v339 = vpop.f32.mrb[0].mxu0
    %v340 = vadd.f32 0.0, %v339
    %v341 = vpop.f32.mrb[0].mxu0
    %342 = vdwg.mxu0
    %v343 = vadd.f32 %v267, %v340
    %v344 = vxor.u32 %v343, 2147483648
    %v345 = vmul.f32 %v344, 1.442695
    %v346 = vpow.pop %v345
    %v347 = vadd.f32 %v346, 1.0
    %v348 = vrcp.pop %v347
    %v349 = vmul.f32 1.0, %v348
    %v350 = vtanh.pop %v343
    %v351 = vsel %vm164, %v349, %v350
    %v352 = vmul.f32 %v351, %v259
    %354 = vrot.lane.b32.xlu0 %v351, 32
    %v355 = vpop.permute.xlu0 %354
    %v357 = vmul.f32 %v351, %v355
    %359 = vrot.lane.b32.xlu0 %v357, 32
    %v360 = vpop.permute.xlu0 %359
    %v362 = vadd.f32 %v352, %v360
    %v363 = vtanh.pop %v362
    %365 = vrot.lane.b32.xlu0 %v363, 32
    %v366 = vpop.permute.xlu0 %365
    %v368 = vmul.f32 %v351, %v366
    %s369 = scalar_lea.vmem [#allocation2], 16
    %v370 = vld [vmem:[%s369] sm:$0xff]
    %372 = vrot.lane.b32.xlu0 %v368, 64
    %v373 = vpop.permute.xlu0 %372
    %v374 = vsel %vm166, %v373, 0
    %376 = vmatprep.subr.mxu0 0.0
    %377 = vmatpush1.msra.mxu0 %v158
    %378 = vmatprep.subr.mxu0 0.0
    %379 = vmatpush1.msra.mxu0 %v159
    %380 = vmatprep.subr.mxu0 0.0
    %381 = vmatpush1.msra.mxu0 %v160
    %382 = vmatprep.subr.mxu0 0.0
    %383 = vmatpush1.msra.mxu0 %v161
    %384 = vmatprep.subr.mxu0 0.0
    %385 = vmatpush1.msra.mxu0 0.0
    %386 = vmatprep.subr.mxu0 0.0
    %387 = vmatpush1.msra.mxu0 0.0
    %388 = vmatprep.subr.mxu0 0.0
    %389 = vmatpush1.msra.mxu0 0.0
    %390 = vmatprep.subr.mxu0 0.0
    %391 = vmatpush1.msra.mxu0 0.0
    %392 = vmatprep.subr.mxu0 0.0
    %393 = vmatpush1.msra.mxu0 0.0
    %394 = vmatprep.subr.mxu0 0.0
    %395 = vmatpush1.msra.mxu0 0.0
    %396 = vmatprep.subr.mxu0 0.0
    %397 = vmatpush1.msra.mxu0 0.0
    %398 = vmatprep.subr.mxu0 0.0
    %399 = vmatpush1.msra.mxu0 0.0
    %400 = vmatprep.subr.mxu0 0.0
    %401 = vmatpush1.msra.mxu0 0.0
    %402 = vmatprep.subr.mxu0 0.0
    %403 = vmatpush1.msra.mxu0 0.0
    %404 = vmatprep.subr.mxu0 0.0
    %405 = vmatpush1.msra.mxu0 0.0
    %406 = vmatprep.subr.mxu0 0.0
    %407 = vmatpush1.msra.mxu0 0.0
    %408 = vmatprep.subr.mxu0 0.0
    %409 = vmatpush1.msra.mxu0 0.0
    %410 = vmatprep.subr.mxu0 0.0
    %411 = vmatpush1.msra.mxu0 0.0
    %412 = vmatprep.subr.mxu0 0.0
    %413 = vmatpush1.msra.mxu0 0.0
    %414 = vmatprep.subr.mxu0 0.0
    %415 = vmatpush1.msra.mxu0 0.0
    %416 = vmatprep.subr.mxu0 0.0
    %417 = vmatpush1.msra.mxu0 0.0
    %418 = vmatprep.subr.mxu0 0.0
    %419 = vmatpush1.msra.mxu0 0.0
    %420 = vmatprep.subr.mxu0 0.0
    %421 = vmatpush1.msra.mxu0 0.0
    %422 = vmatprep.subr.mxu0 0.0
    %423 = vmatpush1.msra.mxu0 0.0
    %424 = vmatprep.subr.mxu0 0.0
    %425 = vmatpush1.msra.mxu0 0.0
    %426 = vmatprep.subr.mxu0 0.0
    %427 = vmatpush1.msra.mxu0 0.0
    %428 = vmatprep.subr.mxu0 0.0
    %429 = vmatpush1.msra.mxu0 0.0
    %430 = vmatprep.subr.mxu0 0.0
    %431 = vmatpush1.msra.mxu0 0.0
    %432 = vmatprep.subr.mxu0 0.0
    %433 = vmatpush1.msra.mxu0 0.0
    %434 = vmatprep.subr.mxu0 0.0
    %435 = vmatpush1.msra.mxu0 0.0
    %436 = vmatprep.subr.mxu0 0.0
    %437 = vmatpush1.msra.mxu0 0.0
    %438 = vmatprep.subr.mxu0 0.0
    %439 = vmatpush1.msra.mxu0 0.0
    %440 = vmatprep.mubr.f32.mxu0 0.0
    %441 = vmatmul.mubr.f32.gmra.mrb[0].mxu0 %v374
    %v442 = vpop.f32.mrb[0].mxu0
    %v443 = vadd.f32 0.0, %v442
    %v444 = vpop.f32.mrb[0].mxu0
    %445 = vdwg.mxu0
    %v446 = vadd.f32 %v370, %v443
    %v447 = vxor.u32 %v446, 2147483648
    %v448 = vmul.f32 %v447, 1.442695
    %v449 = vpow.pop %v448
    %v450 = vadd.f32 %v449, 1.0
    %v451 = vrcp.pop %v450
    %v452 = vmul.f32 1.0, %v451
    %v453 = vtanh.pop %v446
    %v454 = vsel %vm164, %v452, %v453
    %v455 = vmul.f32 %v454, %v362
    %457 = vrot.lane.b32.xlu0 %v454, 32
    %v458 = vpop.permute.xlu0 %457
    %v460 = vmul.f32 %v454, %v458
    %462 = vrot.lane.b32.xlu0 %v460, 32
    %v463 = vpop.permute.xlu0 %462
    %v465 = vadd.f32 %v455, %v463
    %v466 = vtanh.pop %v465
    %468 = vrot.lane.b32.xlu0 %v466, 32
    %v469 = vpop.permute.xlu0 %468
    %v471 = vmul.f32 %v454, %v469
    %s472 = scalar_lea.vmem [#allocation2], 24
    %v473 = vld [vmem:[%s472] sm:$0xff]
    %475 = vrot.lane.b32.xlu0 %v471, 64
    %v476 = vpop.permute.xlu0 %475
    %v477 = vsel %vm166, %v476, 0
    %479 = vmatprep.subr.mxu0 0.0
    %480 = vmatpush1.msra.mxu0 %v158
    %481 = vmatprep.subr.mxu0 0.0
    %482 = vmatpush1.msra.mxu0 %v159
    %483 = vmatprep.subr.mxu0 0.0
    %484 = vmatpush1.msra.mxu0 %v160
    %485 = vmatprep.subr.mxu0 0.0
    %486 = vmatpush1.msra.mxu0 %v161
    %487 = vmatprep.subr.mxu0 0.0
    %488 = vmatpush1.msra.mxu0 0.0
    %489 = vmatprep.subr.mxu0 0.0
    %490 = vmatpush1.msra.mxu0 0.0
    %491 = vmatprep.subr.mxu0 0.0
    %492 = vmatpush1.msra.mxu0 0.0
    %493 = vmatprep.subr.mxu0 0.0
    %494 = vmatpush1.msra.mxu0 0.0
    %495 = vmatprep.subr.mxu0 0.0
    %496 = vmatpush1.msra.mxu0 0.0
    %497 = vmatprep.subr.mxu0 0.0
    %498 = vmatpush1.msra.mxu0 0.0
    %499 = vmatprep.subr.mxu0 0.0
    %500 = vmatpush1.msra.mxu0 0.0
    %501 = vmatprep.subr.mxu0 0.0
    %502 = vmatpush1.msra.mxu0 0.0
    %503 = vmatprep.subr.mxu0 0.0
    %504 = vmatpush1.msra.mxu0 0.0
    %505 = vmatprep.subr.mxu0 0.0
    %506 = vmatpush1.msra.mxu0 0.0
    %507 = vmatprep.subr.mxu0 0.0
    %508 = vmatpush1.msra.mxu0 0.0
    %509 = vmatprep.subr.mxu0 0.0
    %510 = vmatpush1.msra.mxu0 0.0
    %511 = vmatprep.subr.mxu0 0.0
    %512 = vmatpush1.msra.mxu0 0.0
    %513 = vmatprep.subr.mxu0 0.0
    %514 = vmatpush1.msra.mxu0 0.0
    %515 = vmatprep.subr.mxu0 0.0
    %516 = vmatpush1.msra.mxu0 0.0
    %517 = vmatprep.subr.mxu0 0.0
    %518 = vmatpush1.msra.mxu0 0.0
    %519 = vmatprep.subr.mxu0 0.0
    %520 = vmatpush1.msra.mxu0 0.0
    %521 = vmatprep.subr.mxu0 0.0
    %522 = vmatpush1.msra.mxu0 0.0
    %523 = vmatprep.subr.mxu0 0.0
    %524 = vmatpush1.msra.mxu0 0.0
    %525 = vmatprep.subr.mxu0 0.0
    %526 = vmatpush1.msra.mxu0 0.0
    %527 = vmatprep.subr.mxu0 0.0
    %528 = vmatpush1.msra.mxu0 0.0
    %529 = vmatprep.subr.mxu0 0.0
    %530 = vmatpush1.msra.mxu0 0.0
    %531 = vmatprep.subr.mxu0 0.0
    %532 = vmatpush1.msra.mxu0 0.0
    %533 = vmatprep.subr.mxu0 0.0
    %534 = vmatpush1.msra.mxu0 0.0
    %535 = vmatprep.subr.mxu0 0.0
    %536 = vmatpush1.msra.mxu0 0.0
    %537 = vmatprep.subr.mxu0 0.0
    %538 = vmatpush1.msra.mxu0 0.0
    %539 = vmatprep.subr.mxu0 0.0
    %540 = vmatpush1.msra.mxu0 0.0
    %541 = vmatprep.subr.mxu0 0.0
    %542 = vmatpush1.msra.mxu0 0.0
    %543 = vmatprep.mubr.f32.mxu0 0.0
    %544 = vmatmul.mubr.f32.gmra.mrb[0].mxu0 %v477
    %v545 = vpop.f32.mrb[0].mxu0
    %v546 = vadd.f32 0.0, %v545
    %v547 = vpop.f32.mrb[0].mxu0
    %548 = vdwg.mxu0
    %v549 = vadd.f32 %v473, %v546
    %v550 = vxor.u32 %v549, 2147483648
    %v551 = vmul.f32 %v550, 1.442695
    %v552 = vpow.pop %v551
    %v553 = vadd.f32 %v552, 1.0
    %v554 = vrcp.pop %v553
    %v555 = vmul.f32 1.0, %v554
    %v556 = vtanh.pop %v549
    %v557 = vsel %vm164, %v555, %v556
    %v558 = vmul.f32 %v557, %v465
    %560 = vrot.lane.b32.xlu0 %v557, 32
    %v561 = vpop.permute.xlu0 %560
    %v563 = vmul.f32 %v557, %v561
    %565 = vrot.lane.b32.xlu0 %v563, 32
    %v566 = vpop.permute.xlu0 %565
    %v568 = vadd.f32 %v558, %v566
    %v569 = vtanh.pop %v568
    %571 = vrot.lane.b32.xlu0 %v569, 32
    %v572 = vpop.permute.xlu0 %571
    %v574 = vmul.f32 %v557, %v572
    %576 = vrot.lane.b32.xlu0 %v368, 96
    %v577 = vpop.permute.xlu0 %576
    %580 = vrot.lane.b32.xlu0 %v574, 32
    %v581 = vpop.permute.xlu0 %580
    %v583 = vsel %vm166, %v270, %v577
    %vm584 = vcmask 523264
    %v585 = vsel %vm584, %v583, %v471
    %vm586 = vcmask 785408
    %v587 = vsel %vm586, %v585, %v581
    %588 = vst [vmem:[#allocation3] sm:$0xff] %v587
    %s589 = scalar_lea.vmem [#allocation2], 32
    %v590 = vld [vmem:[%s589] sm:$0xff]
    %591 = vrot.lane.b32.xlu0 %v574, 64
    %v592 = vpop.permute.xlu0 %591
    %v593 = vsel %vm166, %v592, 0
    %595 = vmatprep.subr.mxu0 0.0
    %596 = vmatpush1.msra.mxu0 %v158
    %597 = vmatprep.subr.mxu0 0.0
    %598 = vmatpush1.msra.mxu0 %v159
    %599 = vmatprep.subr.mxu0 0.0
    %600 = vmatpush1.msra.mxu0 %v160
    %601 = vmatprep.subr.mxu0 0.0
    %602 = vmatpush1.msra.mxu0 %v161
    %603 = vmatprep.subr.mxu0 0.0
    %604 = vmatpush1.msra.mxu0 0.0
    %605 = vmatprep.subr.mxu0 0.0
    %606 = vmatpush1.msra.mxu0 0.0
    %607 = vmatprep.subr.mxu0 0.0
    %608 = vmatpush1.msra.mxu0 0.0
    %609 = vmatprep.subr.mxu0 0.0
    %610 = vmatpush1.msra.mxu0 0.0
    %611 = vmatprep.subr.mxu0 0.0
    %612 = vmatpush1.msra.mxu0 0.0
    %613 = vmatprep.subr.mxu0 0.0
    %614 = vmatpush1.msra.mxu0 0.0
    %615 = vmatprep.subr.mxu0 0.0
    %616 = vmatpush1.msra.mxu0 0.0
    %617 = vmatprep.subr.mxu0 0.0
    %618 = vmatpush1.msra.mxu0 0.0
    %619 = vmatprep.subr.mxu0 0.0
    %620 = vmatpush1.msra.mxu0 0.0
    %621 = vmatprep.subr.mxu0 0.0
    %622 = vmatpush1.msra.mxu0 0.0
    %623 = vmatprep.subr.mxu0 0.0
    %624 = vmatpush1.msra.mxu0 0.0
    %625 = vmatprep.subr.mxu0 0.0
    %626 = vmatpush1.msra.mxu0 0.0
    %627 = vmatprep.subr.mxu0 0.0
    %628 = vmatpush1.msra.mxu0 0.0
    %629 = vmatprep.subr.mxu0 0.0
    %630 = vmatpush1.msra.mxu0 0.0
    %631 = vmatprep.subr.mxu0 0.0
    %632 = vmatpush1.msra.mxu0 0.0
    %633 = vmatprep.subr.mxu0 0.0
    %634 = vmatpush1.msra.mxu0 0.0
    %635 = vmatprep.subr.mxu0 0.0
    %636 = vmatpush1.msra.mxu0 0.0
    %637 = vmatprep.subr.mxu0 0.0
    %638 = vmatpush1.msra.mxu0 0.0
    %639 = vmatprep.subr.mxu0 0.0
    %640 = vmatpush1.msra.mxu0 0.0
    %641 = vmatprep.subr.mxu0 0.0
    %642 = vmatpush1.msra.mxu0 0.0
    %643 = vmatprep.subr.mxu0 0.0
    %644 = vmatpush1.msra.mxu0 0.0
    %645 = vmatprep.subr.mxu0 0.0
    %646 = vmatpush1.msra.mxu0 0.0
    %647 = vmatprep.subr.mxu0 0.0
    %648 = vmatpush1.msra.mxu0 0.0
    %649 = vmatprep.subr.mxu0 0.0
    %650 = vmatpush1.msra.mxu0 0.0
    %651 = vmatprep.subr.mxu0 0.0
    %652 = vmatpush1.msra.mxu0 0.0
    %653 = vmatprep.subr.mxu0 0.0
    %654 = vmatpush1.msra.mxu0 0.0
    %655 = vmatprep.subr.mxu0 0.0
    %656 = vmatpush1.msra.mxu0 0.0
    %657 = vmatprep.subr.mxu0 0.0
    %658 = vmatpush1.msra.mxu0 0.0
    %659 = vmatprep.mubr.f32.mxu0 0.0
    %660 = vmatmul.mubr.f32.gmra.mrb[0].mxu0 %v593
    %v661 = vpop.f32.mrb[0].mxu0
    %v662 = vadd.f32 0.0, %v661
    %v663 = vpop.f32.mrb[0].mxu0
    %664 = vdwg.mxu0
    %v665 = vadd.f32 %v590, %v662
    %v666 = vxor.u32 %v665, 2147483648
    %v667 = vmul.f32 %v666, 1.442695
    %v668 = vpow.pop %v667
    %v669 = vadd.f32 %v668, 1.0
    %v670 = vrcp.pop %v669
    %v671 = vmul.f32 1.0, %v670
    %v672 = vtanh.pop %v665
    %v673 = vsel %vm164, %v671, %v672
    %v674 = vmul.f32 %v673, %v568
    %676 = vrot.lane.b32.xlu0 %v673, 32
    %v677 = vpop.permute.xlu0 %676
    %v679 = vmul.f32 %v673, %v677
    %681 = vrot.lane.b32.xlu0 %v679, 32
    %v682 = vpop.permute.xlu0 %681
    %v684 = vadd.f32 %v674, %v682
    %v685 = vtanh.pop %v684
    %687 = vrot.lane.b32.xlu0 %v685, 32
    %v688 = vpop.permute.xlu0 %687
    %v690 = vmul.f32 %v673, %v688
    %s691 = scalar_lea.vmem [#allocation2], 40
    %v692 = vld [vmem:[%s691] sm:$0xff]
    %694 = vrot.lane.b32.xlu0 %v690, 64
    %v695 = vpop.permute.xlu0 %694
    %v696 = vsel %vm166, %v695, 0
    %698 = vmatprep.subr.mxu0 0.0
    %699 = vmatpush1.msra.mxu0 %v158
    %700 = vmatprep.subr.mxu0 0.0
    %701 = vmatpush1.msra.mxu0 %v159
    %702 = vmatprep.subr.mxu0 0.0
    %703 = vmatpush1.msra.mxu0 %v160
    %704 = vmatprep.subr.mxu0 0.0
    %705 = vmatpush1.msra.mxu0 %v161
    %706 = vmatprep.subr.mxu0 0.0
    %707 = vmatpush1.msra.mxu0 0.0
    %708 = vmatprep.subr.mxu0 0.0
    %709 = vmatpush1.msra.mxu0 0.0
    %710 = vmatprep.subr.mxu0 0.0
    %711 = vmatpush1.msra.mxu0 0.0
    %712 = vmatprep.subr.mxu0 0.0
    %713 = vmatpush1.msra.mxu0 0.0
    %714 = vmatprep.subr.mxu0 0.0
    %715 = vmatpush1.msra.mxu0 0.0
    %716 = vmatprep.subr.mxu0 0.0
    %717 = vmatpush1.msra.mxu0 0.0
    %718 = vmatprep.subr.mxu0 0.0
    %719 = vmatpush1.msra.mxu0 0.0
    %720 = vmatprep.subr.mxu0 0.0
    %721 = vmatpush1.msra.mxu0 0.0
    %722 = vmatprep.subr.mxu0 0.0
    %723 = vmatpush1.msra.mxu0 0.0
    %724 = vmatprep.subr.mxu0 0.0
    %725 = vmatpush1.msra.mxu0 0.0
    %726 = vmatprep.subr.mxu0 0.0
    %727 = vmatpush1.msra.mxu0 0.0
    %728 = vmatprep.subr.mxu0 0.0
    %729 = vmatpush1.msra.mxu0 0.0
    %730 = vmatprep.subr.mxu0 0.0
    %731 = vmatpush1.msra.mxu0 0.0
    %732 = vmatprep.subr.mxu0 0.0
    %733 = vmatpush1.msra.mxu0 0.0
    %734 = vmatprep.subr.mxu0 0.0
    %735 = vmatpush1.msra.mxu0 0.0
    %736 = vmatprep.subr.mxu0 0.0
    %737 = vmatpush1.msra.mxu0 0.0
    %738 = vmatprep.subr.mxu0 0.0
    %739 = vmatpush1.msra.mxu0 0.0
    %740 = vmatprep.subr.mxu0 0.0
    %741 = vmatpush1.msra.mxu0 0.0
    %742 = vmatprep.subr.mxu0 0.0
    %743 = vmatpush1.msra.mxu0 0.0
    %744 = vmatprep.subr.mxu0 0.0
    %745 = vmatpush1.msra.mxu0 0.0
    %746 = vmatprep.subr.mxu0 0.0
    %747 = vmatpush1.msra.mxu0 0.0
    %748 = vmatprep.subr.mxu0 0.0
    %749 = vmatpush1.msra.mxu0 0.0
    %750 = vmatprep.subr.mxu0 0.0
    %751 = vmatpush1.msra.mxu0 0.0
    %752 = vmatprep.subr.mxu0 0.0
    %753 = vmatpush1.msra.mxu0 0.0
    %754 = vmatprep.subr.mxu0 0.0
    %755 = vmatpush1.msra.mxu0 0.0
    %756 = vmatprep.subr.mxu0 0.0
    %757 = vmatpush1.msra.mxu0 0.0
    %758 = vmatprep.subr.mxu0 0.0
    %759 = vmatpush1.msra.mxu0 0.0
    %760 = vmatprep.subr.mxu0 0.0
    %761 = vmatpush1.msra.mxu0 0.0
    %762 = vmatprep.mubr.f32.mxu0 0.0
    %763 = vmatmul.mubr.f32.gmra.mrb[0].mxu0 %v696
    %v764 = vpop.f32.mrb[0].mxu0
    %v765 = vadd.f32 0.0, %v764
    %v766 = vpop.f32.mrb[0].mxu0
    %767 = vdwg.mxu0
    %v768 = vadd.f32 %v692, %v765
    %v769 = vxor.u32 %v768, 2147483648
    %v770 = vmul.f32 %v769, 1.442695
    %v771 = vpow.pop %v770
    %v772 = vadd.f32 %v771, 1.0
    %v773 = vrcp.pop %v772
    %v774 = vmul.f32 1.0, %v773
    %v775 = vtanh.pop %v768
    %v776 = vsel %vm164, %v774, %v775
    %v777 = vmul.f32 %v776, %v684
    %779 = vrot.lane.b32.xlu0 %v776, 32
    %v780 = vpop.permute.xlu0 %779
    %v782 = vmul.f32 %v776, %v780
    %784 = vrot.lane.b32.xlu0 %v782, 32
    %v785 = vpop.permute.xlu0 %784
    %v787 = vadd.f32 %v777, %v785
    %v788 = vtanh.pop %v787
    %790 = vrot.lane.b32.xlu0 %v788, 32
    %v791 = vpop.permute.xlu0 %790
    %v793 = vmul.f32 %v776, %v791
    %s794 = scalar_lea.vmem [#allocation2], 48
    %v795 = vld [vmem:[%s794] sm:$0xff]
    %797 = vrot.lane.b32.xlu0 %v793, 64
    %v798 = vpop.permute.xlu0 %797
    %v799 = vsel %vm166, %v798, 0
    %801 = vmatprep.subr.mxu0 0.0
    %802 = vmatpush1.msra.mxu0 %v158
    %803 = vmatprep.subr.mxu0 0.0
    %804 = vmatpush1.msra.mxu0 %v159
    %805 = vmatprep.subr.mxu0 0.0
    %806 = vmatpush1.msra.mxu0 %v160
    %807 = vmatprep.subr.mxu0 0.0
    %808 = vmatpush1.msra.mxu0 %v161
    %809 = vmatprep.subr.mxu0 0.0
    %810 = vmatpush1.msra.mxu0 0.0
    %811 = vmatprep.subr.mxu0 0.0
    %812 = vmatpush1.msra.mxu0 0.0
    %813 = vmatprep.subr.mxu0 0.0
    %814 = vmatpush1.msra.mxu0 0.0
    %815 = vmatprep.subr.mxu0 0.0
    %816 = vmatpush1.msra.mxu0 0.0
    %817 = vmatprep.subr.mxu0 0.0
    %818 = vmatpush1.msra.mxu0 0.0
    %819 = vmatprep.subr.mxu0 0.0
    %820 = vmatpush1.msra.mxu0 0.0
    %821 = vmatprep.subr.mxu0 0.0
    %822 = vmatpush1.msra.mxu0 0.0
    %823 = vmatprep.subr.mxu0 0.0
    %824 = vmatpush1.msra.mxu0 0.0
    %825 = vmatprep.subr.mxu0 0.0
    %826 = vmatpush1.msra.mxu0 0.0
    %827 = vmatprep.subr.mxu0 0.0
    %828 = vmatpush1.msra.mxu0 0.0
    %829 = vmatprep.subr.mxu0 0.0
    %830 = vmatpush1.msra.mxu0 0.0
    %831 = vmatprep.subr.mxu0 0.0
    %832 = vmatpush1.msra.mxu0 0.0
    %833 = vmatprep.subr.mxu0 0.0
    %834 = vmatpush1.msra.mxu0 0.0
    %835 = vmatprep.subr.mxu0 0.0
    %836 = vmatpush1.msra.mxu0 0.0
    %837 = vmatprep.subr.mxu0 0.0
    %838 = vmatpush1.msra.mxu0 0.0
    %839 = vmatprep.subr.mxu0 0.0
    %840 = vmatpush1.msra.mxu0 0.0
    %841 = vmatprep.subr.mxu0 0.0
    %842 = vmatpush1.msra.mxu0 0.0
    %843 = vmatprep.subr.mxu0 0.0
    %844 = vmatpush1.msra.mxu0 0.0
    %845 = vmatprep.subr.mxu0 0.0
    %846 = vmatpush1.msra.mxu0 0.0
    %847 = vmatprep.subr.mxu0 0.0
    %848 = vmatpush1.msra.mxu0 0.0
    %849 = vmatprep.subr.mxu0 0.0
    %850 = vmatpush1.msra.mxu0 0.0
    %851 = vmatprep.subr.mxu0 0.0
    %852 = vmatpush1.msra.mxu0 0.0
    %853 = vmatprep.subr.mxu0 0.0
    %854 = vmatpush1.msra.mxu0 0.0
    %855 = vmatprep.subr.mxu0 0.0
    %856 = vmatpush1.msra.mxu0 0.0
    %857 = vmatprep.subr.mxu0 0.0
    %858 = vmatpush1.msra.mxu0 0.0
    %859 = vmatprep.subr.mxu0 0.0
    %860 = vmatpush1.msra.mxu0 0.0
    %861 = vmatprep.subr.mxu0 0.0
    %862 = vmatpush1.msra.mxu0 0.0
    %863 = vmatprep.subr.mxu0 0.0
    %864 = vmatpush1.msra.mxu0 0.0
    %865 = vmatprep.mubr.f32.mxu0 0.0
    %866 = vmatmul.mubr.f32.gmra.mrb[0].mxu0 %v799
    %v867 = vpop.f32.mrb[0].mxu0
    %v868 = vadd.f32 0.0, %v867
    %v869 = vpop.f32.mrb[0].mxu0
    %870 = vdwg.mxu0
    %v871 = vadd.f32 %v795, %v868
    %v872 = vxor.u32 %v871, 2147483648
    %v873 = vmul.f32 %v872, 1.442695
    %v874 = vpow.pop %v873
    %v875 = vadd.f32 %v874, 1.0
    %v876 = vrcp.pop %v875
    %v877 = vmul.f32 1.0, %v876
    %v878 = vtanh.pop %v871
    %v879 = vsel %vm164, %v877, %v878
    %v880 = vmul.f32 %v879, %v787
    %882 = vrot.lane.b32.xlu0 %v879, 32
    %v883 = vpop.permute.xlu0 %882
    %v885 = vmul.f32 %v879, %v883
    %887 = vrot.lane.b32.xlu0 %v885, 32
    %v888 = vpop.permute.xlu0 %887
    %v890 = vadd.f32 %v880, %v888
    %v891 = vtanh.pop %v890
    %893 = vrot.lane.b32.xlu0 %v891, 32
    %v894 = vpop.permute.xlu0 %893
    %v896 = vmul.f32 %v879, %v894
    %s897 = scalar_lea.vmem [#allocation2], 56
    %v898 = vld [vmem:[%s897] sm:$0xff]
    %900 = vrot.lane.b32.xlu0 %v896, 64
    %v901 = vpop.permute.xlu0 %900
    %v902 = vsel %vm166, %v901, 0
    %904 = vmatprep.subr.mxu0 0.0
    %905 = vmatpush1.msra.mxu0 %v158
    %906 = vmatprep.subr.mxu0 0.0
    %907 = vmatpush1.msra.mxu0 %v159
    %908 = vmatprep.subr.mxu0 0.0
    %909 = vmatpush1.msra.mxu0 %v160
    %910 = vmatprep.subr.mxu0 0.0
    %911 = vmatpush1.msra.mxu0 %v161
    %912 = vmatprep.subr.mxu0 0.0
    %913 = vmatpush1.msra.mxu0 0.0
    %914 = vmatprep.subr.mxu0 0.0
    %915 = vmatpush1.msra.mxu0 0.0
    %916 = vmatprep.subr.mxu0 0.0
    %917 = vmatpush1.msra.mxu0 0.0
    %918 = vmatprep.subr.mxu0 0.0
    %919 = vmatpush1.msra.mxu0 0.0
    %920 = vmatprep.subr.mxu0 0.0
    %921 = vmatpush1.msra.mxu0 0.0
    %922 = vmatprep.subr.mxu0 0.0
    %923 = vmatpush1.msra.mxu0 0.0
    %924 = vmatprep.subr.mxu0 0.0
    %925 = vmatpush1.msra.mxu0 0.0
    %926 = vmatprep.subr.mxu0 0.0
    %927 = vmatpush1.msra.mxu0 0.0
    %928 = vmatprep.subr.mxu0 0.0
    %929 = vmatpush1.msra.mxu0 0.0
    %930 = vmatprep.subr.mxu0 0.0
    %931 = vmatpush1.msra.mxu0 0.0
    %932 = vmatprep.subr.mxu0 0.0
    %933 = vmatpush1.msra.mxu0 0.0
    %934 = vmatprep.subr.mxu0 0.0
    %935 = vmatpush1.msra.mxu0 0.0
    %936 = vmatprep.subr.mxu0 0.0
    %937 = vmatpush1.msra.mxu0 0.0
    %938 = vmatprep.subr.mxu0 0.0
    %939 = vmatpush1.msra.mxu0 0.0
    %940 = vmatprep.subr.mxu0 0.0
    %941 = vmatpush1.msra.mxu0 0.0
    %942 = vmatprep.subr.mxu0 0.0
    %943 = vmatpush1.msra.mxu0 0.0
    %944 = vmatprep.subr.mxu0 0.0
    %945 = vmatpush1.msra.mxu0 0.0
    %946 = vmatprep.subr.mxu0 0.0
    %947 = vmatpush1.msra.mxu0 0.0
    %948 = vmatprep.subr.mxu0 0.0
    %949 = vmatpush1.msra.mxu0 0.0
    %950 = vmatprep.subr.mxu0 0.0
    %951 = vmatpush1.msra.mxu0 0.0
    %952 = vmatprep.subr.mxu0 0.0
    %953 = vmatpush1.msra.mxu0 0.0
    %954 = vmatprep.subr.mxu0 0.0
    %955 = vmatpush1.msra.mxu0 0.0
    %956 = vmatprep.subr.mxu0 0.0
    %957 = vmatpush1.msra.mxu0 0.0
    %958 = vmatprep.subr.mxu0 0.0
    %959 = vmatpush1.msra.mxu0 0.0
    %960 = vmatprep.subr.mxu0 0.0
    %961 = vmatpush1.msra.mxu0 0.0
    %962 = vmatprep.subr.mxu0 0.0
    %963 = vmatpush1.msra.mxu0 0.0
    %964 = vmatprep.subr.mxu0 0.0
    %965 = vmatpush1.msra.mxu0 0.0
    %966 = vmatprep.subr.mxu0 0.0
    %967 = vmatpush1.msra.mxu0 0.0
    %968 = vmatprep.mubr.f32.mxu0 0.0
    %969 = vmatmul.mubr.f32.gmra.mrb[0].mxu0 %v902
    %v970 = vpop.f32.mrb[0].mxu0
    %v971 = vadd.f32 0.0, %v970
    %v972 = vpop.f32.mrb[0].mxu0
    %973 = vdwg.mxu0
    %v974 = vadd.f32 %v898, %v971
    %v975 = vxor.u32 %v974, 2147483648
    %v976 = vmul.f32 %v975, 1.442695
    %v977 = vpow.pop %v976
    %v978 = vadd.f32 %v977, 1.0
    %v979 = vrcp.pop %v978
    %v980 = vmul.f32 1.0, %v979
    %v981 = vtanh.pop %v974
    %v982 = vsel %vm164, %v980, %v981
    %v983 = vmul.f32 %v982, %v890
    %985 = vrot.lane.b32.xlu0 %v982, 32
    %v986 = vpop.permute.xlu0 %985
    %v988 = vmul.f32 %v982, %v986
    %990 = vrot.lane.b32.xlu0 %v988, 32
    %v991 = vpop.permute.xlu0 %990
    %v993 = vadd.f32 %v983, %v991
    %v994 = vtanh.pop %v993
    %996 = vrot.lane.b32.xlu0 %v994, 32
    %v997 = vpop.permute.xlu0 %996
    %v999 = vmul.f32 %v982, %v997
    %1001 = vrot.lane.b32.xlu0 %v793, 96
    %v1002 = vpop.permute.xlu0 %1001
    %1005 = vrot.lane.b32.xlu0 %v999, 32
    %v1006 = vpop.permute.xlu0 %1005
    %v1008 = vsel %vm166, %v695, %v1002
    %v1009 = vsel %vm584, %v1008, %v896
    %v1010 = vsel %vm586, %v1009, %v1006
    %1011 = vst [vmem:[#allocation3 + $0x8] sm:$0xff] %v1010
    %1012 = vrot.lane.b32.xlu0 %v999, 64
    %v1013 = vpop.permute.xlu0 %1012
    %1015 = vst.msk [vmem:[#allocation5] sm:$0xff] %vm166, %v1013
    %1017 = vrot.lane.b32.xlu0 %v993, 96
    %v1018 = vpop.permute.xlu0 %1017
    %1020 = vst.msk [vmem:[#allocation7] sm:$0xff] %vm166, %v1018
    // Predicated region
    $region18: #{tpu_custom_call.1} parent=1 // pred_check
      _
    $region19: #{tpu_custom_call.1} parent=1 // pred_check_branch
      %1022 = sbr.rel (0) target = $region21
    $region20: #{tpu_custom_call.1} parent=1 // pred_region
      %s1024 = ssub.s32 256, 256
      %1025 = vsyncadd [#allocation4], %s1024
      %s1027 = sshll.u32 [#allocation3], 4
      %s1028 = int_to_ptr.vmem [resolvable:$true] %s1027
      %1030 = dma.vmem_to_hbm [thread:$0]  %s1028, 256, %s4, [#allocation4]
    $region21: #{tpu_custom_call.1} parent=1 // pred_fallthru
      _
    // Predicated region
    $region22: #{tpu_custom_call.1} parent=1 // pred_check
      _
    $region23: #{tpu_custom_call.1} parent=1 // pred_check_branch
      %1032 = sbr.rel (0) target = $region25
    $region24: #{tpu_custom_call.1} parent=1 // pred_region
      %s1034 = ssub.s32 128, 128
      %1035 = vsyncadd [#allocation6], %s1034
      %s1037 = sshll.u32 [#allocation5], 4
      %s1038 = int_to_ptr.vmem [resolvable:$true] %s1037
      %1040 = dma.vmem_to_hbm [thread:$0]  %s1038, 128, %s5, [#allocation6]
    $region25: #{tpu_custom_call.1} parent=1 // pred_fallthru
      _
    // Predicated region
    $region26: #{tpu_custom_call.1} parent=1 // pred_check
      _
    $region27: #{tpu_custom_call.1} parent=1 // pred_check_branch
      %1042 = sbr.rel (0) target = $region29
    $region28: #{tpu_custom_call.1} parent=1 // pred_region
      %s1044 = ssub.s32 128, 128
      %1045 = vsyncadd [#allocation6], %s1044
      %s1047 = sshll.u32 [#allocation7], 4
      %s1048 = int_to_ptr.vmem [resolvable:$true] %s1047
      %1050 = dma.vmem_to_hbm [thread:$0]  %s1048, 128, %s6, [#allocation6]
    $region29: #{tpu_custom_call.1} parent=1 // pred_fallthru
      _
    // Predicated region
    $region30: #{tpu_custom_call.1} parent=1 // pred_check
      _
    $region31: #{tpu_custom_call.1} parent=1 // pred_check_branch
      %1052 = sbr.rel (0) target = $region33
    $region32: #{tpu_custom_call.1} parent=1 // pred_region
      %1053 = dma.done [#allocation4], 256
    $region33: #{tpu_custom_call.1} parent=1 // pred_fallthru
      _
    // Predicated region
    $region34: #{tpu_custom_call.1} parent=1 // pred_check
      _
    $region35: #{tpu_custom_call.1} parent=1 // pred_check_branch
      %1055 = sbr.rel (0) target = $region37
    $region36: #{tpu_custom_call.1} parent=1 // pred_region
      %1056 = dma.done [#allocation6], 128
    $region37: #{tpu_custom_call.1} parent=1 // pred_fallthru
      _
    // Predicated region
    $region38: #{tpu_custom_call.1} parent=1 // pred_check
      _
    $region39: #{tpu_custom_call.1} parent=1 // pred_check_branch
      %1058 = sbr.rel (0) target = $region41
    $region40: #{tpu_custom_call.1} parent=1 // pred_region
      %1059 = dma.done [#allocation6], 128
    $region41: #{tpu_custom_call.1} parent=1 // pred_fallthru
      _
    %1060 = vsyncpa [#allocation4], 1
    %1061 = vsyncpa [#allocation6], 1

</llo_original>
